<compile_context>
chip_gen: v5e
topology: v5e:2x2
jax: 0.10.0
libtpu: 0.0.40
codegen_flags: <defaults>
</compile_context>

<pallas_src>
import jax
import jax.numpy as jnp
from jax.experimental import pallas as pl
from jax.experimental.pallas import tpu as pltpu


def attention_kernel(enc_ref, h_ref, wh_ref, we_ref, b_ref, v_ref, out_ref):
    # enc_ref: [S, tb, E2] f32/bf16 (native torch [S, B, E2] layout, batch-tiled)
    # h_ref:   [tb, Dd]    f32
    # wh_ref:  [Dd, Dd]    bf16  (pre-transposed: hidden @ W_h^T)
    # we_ref:  [E2, Dd]    bf16  (pre-transposed: enc @ W_e^T)
    # b_ref:   [1, Dd]     f32
    # v_ref:   [1, Dd]     f32
    # out_ref: [tb, S]     f32   (softmax over S)
    S, TB, E2 = enc_ref.shape

    # Hidden branch + bias folded once per block: [tb, Dd] (tiny MXU matmul).
    hb = jnp.dot(h_ref[...].astype(jnp.bfloat16), wh_ref[...],
                 preferred_element_type=jnp.float32) + b_ref[...]

    # Encoder branch: flatten (s, b) rows (lane dim E2 untouched, tb a multiple
    # of 8 sublanes -> layout-cheap) and hit the MXU with bf16 operands, f32 acc.
    enc2 = enc_ref[...].astype(jnp.bfloat16).reshape(S * TB, E2)
    eW = jnp.dot(enc2, we_ref[...],
                 preferred_element_type=jnp.float32).reshape(S, TB, -1)

    # energy = tanh(enc@We^T + hidden@Wh^T + b)   (tanh -> EUP, f32)
    energy = jnp.tanh(eW + hb[None, :, :])                       # [S, tb, Dd]

    # v-projection as VPU multiply + lane reduction (no degenerate N=1 matmul).
    scores = jnp.sum(energy * v_ref[...][None, :, :], axis=-1)   # [S, tb]
    scores = scores.T                                            # [tb, S]

    # Softmax over S (lane axis).  Exact divide: rows must sum to 1.
    m = jnp.max(scores, axis=-1, keepdims=True)
    e = jnp.exp(scores - m)
    denom = jnp.sum(e, axis=-1, keepdims=True)
    out_ref[...] = e / denom


def _pad128(x):
    return ((x + 127) // 128) * 128


def _pad8(x):
    return ((x + 7) // 8) * 8


def _vmem_config():
    """Per-generation VMEM limit for the pallas_call and a tile-size budget.
    v7x (64 MiB/TC) -> 48 MiB limit, ~36 MiB tile budget;
    v5e/v6e (128 MiB) -> 64 MiB limit, ~48 MiB tile budget."""
    try:
        phys = int(pltpu.get_tpu_info().vmem_capacity_bytes)
    except Exception:
        phys = 64 << 20  # conservative: assume smallest per-core VMEM (v7x)
    limit = min(max(phys // 2, 48 << 20), 64 << 20)
    tile_budget = (3 * limit) // 4
    return limit, tile_budget


def _pick_batch_tile(B, S, E2, Dd, *, enc_itemsize=4, budget_bytes=24 << 20,
                     require_two_steps=True):
    """Largest batch tile (multiple of 8 dividing B, else B) whose lane-padded,
    double-buffered footprint fits `budget_bytes`.  When B >= 16 and
    require_two_steps, cap at B//2 so the 'parallel' grid has >= 2 steps
    (v7x 2-TC split + real pipelining)."""
    E2p, Ddp, Sp = _pad128(E2), _pad128(Dd), _pad128(S)

    def live_bytes(tb):
        tbp = _pad8(tb)
        enc_blk = S * tbp * E2p * enc_itemsize          # enc block (lane padded)
        out_blk = tbp * Sp * 4                          # output block
        inter = 2 * S * tbp * Ddp * 4                   # eW + energy f32
        small = 4 * (Ddp * Ddp + E2p * Ddp + 2 * Ddp + tbp * Ddp)
        return 2 * enc_blk + 2 * out_blk + inter + small  # x2 = double buffering

    cands = sorted({t for t in range(8, B + 1, 8) if B % t == 0} | {B},
                   reverse=True)
    if require_two_steps and B >= 16:
        capped = [t for t in cands if t <= B // 2]
        cands = capped if capped else [min(cands)]
    for t in cands:
        if live_bytes(t) <= budget_bytes:
            return t
    return min(cands)


def prepare_attention_params(w_attn, b_attn, v_w):
    """One-time weight prep (hoist out of decode loops).
    w_attn: [Dd, Dd + E2] torch nn.Linear weight, cat order = (hidden, enc);
    b_attn: [Dd]; v_w: [1, Dd]."""
    Dd = w_attn.shape[0]
    wh = jnp.transpose(w_attn[:, :Dd]).astype(jnp.bfloat16)      # [Dd, Dd]
    we = jnp.transpose(w_attn[:, Dd:]).astype(jnp.bfloat16)      # [E2, Dd]
    b = b_attn.reshape(1, Dd).astype(jnp.float32)                # [1, Dd]
    v = v_w.reshape(1, Dd).astype(jnp.float32)                   # [1, Dd]
    return wh, we, b, v


def attention_forward(hidden, encoder_outputs, params, *, batch_tile=None):
    """hidden: [B, Dd]; encoder_outputs: [S, B, E2] (native torch layout,
    f32 or bf16 -- bf16 halves the dominant DMA stream); params from
    prepare_attention_params().  Returns softmax attention [B, S] (f32)."""
    S, B, E2 = encoder_outputs.shape
    Dd = hidden.shape[1]
    wh, we, b, v = params

    limit_bytes, tile_budget = _vmem_config()
    tb = batch_tile if batch_tile is not None else _pick_batch_tile(
        B, S, E2, Dd,
        enc_itemsize=jnp.dtype(encoder_outputs.dtype).itemsize,
        budget_bytes=tile_budget)
    if B % tb != 0:
        tb = B  # single grid step: correct, but disables pipelining / 2-TC split
    grid = (B // tb,)

    return pl.pallas_call(
        attention_kernel,
        out_shape=jax.ShapeDtypeStruct((B, S), jnp.float32),
        grid=grid,
        in_specs=[
            pl.BlockSpec((S, tb, E2), lambda i: (0, i, 0)),      # enc (native layout)
            pl.BlockSpec((tb, Dd), lambda i: (i, 0)),            # hidden
            pl.BlockSpec((Dd, Dd), lambda i: (0, 0)),            # W_h^T (replicated)
            pl.BlockSpec((E2, Dd), lambda i: (0, 0)),            # W_e^T (replicated)
            pl.BlockSpec((1, Dd), lambda i: (0, 0)),             # bias
            pl.BlockSpec((1, Dd), lambda i: (0, 0)),             # v row
        ],
        out_specs=pl.BlockSpec((tb, S), lambda i: (i, 0)),
        compiler_params=pltpu.CompilerParams(
            dimension_semantics=("parallel",),
            vmem_limit_bytes=limit_bytes,
        ),
    )(encoder_outputs, hidden.astype(jnp.float32), wh, we, b, v)


def attention_reference(hidden, encoder_outputs, w_attn, b_attn, v_w):
    S, B, E2 = encoder_outputs.shape
    h = jnp.repeat(hidden[:, None, :], S, axis=1)                # [B, S, Dd]
    enc = jnp.transpose(encoder_outputs, (1, 0, 2)).astype(jnp.float32)
    cat = jnp.concatenate([h, enc], axis=2)                      # [B, S, Dd+E2]
    energy = jnp.tanh(jnp.einsum("bsk,dk->bsd", cat, w_attn) + b_attn)
    attn = jnp.einsum("bsd,od->bso", energy, v_w)[..., 0]        # [B, S]
    return jax.nn.softmax(attn, axis=1)


if __name__ == "__main__":
    enc_hid_dim = 16
    dec_hid_dim = 32
    batch = 16          # small, but lets the kernel run a real 2-step batch grid
    src_len = 8
    E2 = 2 * enc_hid_dim

    key = jax.random.PRNGKey(0)
    k1, k2, k3, k4, k5 = jax.random.split(key, 5)

    # deterministic parameter init (PyTorch nn.Linear-style uniform bounds)
    fan_in_attn = E2 + dec_hid_dim
    bound_attn = 1.0 / (fan_in_attn ** 0.5)
    w_attn = jax.random.uniform(k1, (dec_hid_dim, fan_in_attn), jnp.float32,
                                -bound_attn, bound_attn)
    b_attn = jax.random.uniform(k2, (dec_hid_dim,), jnp.float32,
                                -bound_attn, bound_attn)
    bound_v = 1.0 / (dec_hid_dim ** 0.5)
    v_w = jax.random.uniform(k3, (1, dec_hid_dim), jnp.float32, -bound_v, bound_v)

    hidden = jax.random.normal(k4, (batch, dec_hid_dim), jnp.float32)
    encoder_outputs = jax.random.normal(k5, (src_len, batch, E2), jnp.float32)

    params = prepare_attention_params(w_attn, b_attn, v_w)   # hoisted weight prep

    # tile picker -> tb=8, grid=(2,): exercises the pipelined / parallel batch axis.
    out = attention_forward(hidden, encoder_outputs, params)
    out = jax.block_until_ready(out)

    ref = attention_reference(hidden, encoder_outputs, w_attn, b_attn, v_w)
    assert out.shape == (batch, src_len)
    # bf16 matmul operands -> slightly relaxed tolerance vs the f32 reference.
    assert jnp.allclose(out, ref, atol=2e-2, rtol=0.0), \
        float(jnp.max(jnp.abs(out - ref)))
    # exact divide in the epilogue -> rows sum to 1 within f32 rounding.
    assert jnp.allclose(jnp.sum(out, axis=1), jnp.ones((batch,)), atol=1e-3)

    print("KERNEL_OK")
</pallas_src>

<mosaic_0001>
module attributes {stable_mosaic.version = 11 : i64} {
  func.func @attention_kernel(%arg0: i32, %arg1: memref<8x8x32xf32, #tpu.memory_space<vmem>>, %arg2: memref<8x32xf32, #tpu.memory_space<vmem>>, %arg3: memref<32x32xbf16, #tpu.memory_space<vmem>>, %arg4: memref<32x32xbf16, #tpu.memory_space<vmem>>, %arg5: memref<1x32xf32, #tpu.memory_space<vmem>>, %arg6: memref<1x32xf32, #tpu.memory_space<vmem>>, %arg7: memref<8x8xf32, #tpu.memory_space<vmem>>) attributes {dimension_semantics = [#tpu.dimension_semantics<parallel>], iteration_bounds = array<i64: 2>, scalar_prefetch = 0 : i64, scratch_operands = 0 : i64, tpu.core_type = #tpu.core_type<tc>, window_params = [{transform_indices = @transform_0, window_bounds = array<i64: 8, 8, 32>}, {transform_indices = @transform_1, window_bounds = array<i64: 8, 32>}, {pipeline_mode = #tpu.pipeline_mode<synchronous>, transform_indices = @transform_2, window_bounds = array<i64: 32, 32>}, {pipeline_mode = #tpu.pipeline_mode<synchronous>, transform_indices = @transform_3, window_bounds = array<i64: 32, 32>}, {pipeline_mode = #tpu.pipeline_mode<synchronous>, transform_indices = @transform_4, window_bounds = array<i64: 1, 32>}, {pipeline_mode = #tpu.pipeline_mode<synchronous>, transform_indices = @transform_5, window_bounds = array<i64: 1, 32>}, {transform_indices = @transform_6, window_bounds = array<i64: 8, 8>}]} {
    %c0 = arith.constant 0 : index
    %c0_0 = arith.constant 0 : index
    %0 = vector.load %arg2[%c0, %c0_0] : memref<8x32xf32, #tpu.memory_space<vmem>>, vector<8x32xf32>
    %1 = arith.truncf %0 : vector<8x32xf32> to vector<8x32xbf16>
    %c0_1 = arith.constant 0 : index
    %c0_2 = arith.constant 0 : index
    %2 = vector.load %arg3[%c0_1, %c0_2] : memref<32x32xbf16, #tpu.memory_space<vmem>>, vector<32x32xbf16>
    %cst = arith.constant dense<0.000000e+00> : vector<8x32xf32>
    %3 = tpu.matmul %1, %2, %cst {dimension_numbers = #tpu.dot_dimension_numbers<[1], [0], [0], [1], [0, 0, 1, 1], [], []>} : vector<8x32xbf16>, vector<32x32xbf16>, vector<8x32xf32> -> vector<8x32xf32>
    %c0_3 = arith.constant 0 : index
    %c0_4 = arith.constant 0 : index
    %4 = vector.load %arg5[%c0_3, %c0_4] : memref<1x32xf32, #tpu.memory_space<vmem>>, vector<1x32xf32>
    %5 = vector.broadcast %4 : vector<1x32xf32> to vector<8x32xf32>
    %6 = arith.addf %3, %5 : vector<8x32xf32>
    %c0_5 = arith.constant 0 : index
    %c0_6 = arith.constant 0 : index
    %c0_7 = arith.constant 0 : index
    %7 = vector.load %arg1[%c0_5, %c0_6, %c0_7] : memref<8x8x32xf32, #tpu.memory_space<vmem>>, vector<8x8x32xf32>
    %8 = arith.truncf %7 : vector<8x8x32xf32> to vector<8x8x32xbf16>
    %9 = vector.shape_cast %8 : vector<8x8x32xbf16> to vector<64x32xbf16>
    %c0_8 = arith.constant 0 : index
    %c0_9 = arith.constant 0 : index
    %10 = vector.load %arg4[%c0_8, %c0_9] : memref<32x32xbf16, #tpu.memory_space<vmem>>, vector<32x32xbf16>
    %cst_10 = arith.constant dense<0.000000e+00> : vector<64x32xf32>
    %11 = tpu.matmul %9, %10, %cst_10 {dimension_numbers = #tpu.dot_dimension_numbers<[1], [0], [0], [1], [0, 0, 1, 1], [], []>} : vector<64x32xbf16>, vector<32x32xbf16>, vector<64x32xf32> -> vector<64x32xf32>
    %12 = vector.shape_cast %11 : vector<64x32xf32> to vector<8x8x32xf32>
    %13 = vector.shape_cast %6 : vector<8x32xf32> to vector<1x8x32xf32>
    %14 = vector.broadcast %13 : vector<1x8x32xf32> to vector<8x8x32xf32>
    %15 = arith.addf %12, %14 : vector<8x8x32xf32>
    %16 = math.tanh %15 : vector<8x8x32xf32>
    %c0_11 = arith.constant 0 : index
    %c0_12 = arith.constant 0 : index
    %17 = vector.load %arg6[%c0_11, %c0_12] : memref<1x32xf32, #tpu.memory_space<vmem>>, vector<1x32xf32>
    %18 = vector.shape_cast %17 : vector<1x32xf32> to vector<1x1x32xf32>
    %19 = vector.broadcast %18 : vector<1x1x32xf32> to vector<8x8x32xf32>
    %20 = arith.mulf %16, %19 : vector<8x8x32xf32>
    %cst_13 = arith.constant dense<0.000000e+00> : vector<8x8xf32>
    %21 = vector.multi_reduction <add>, %20, %cst_13 [2] : vector<8x8x32xf32> to vector<8x8xf32>
    %22 = tpu.transpose %21, [1, 0] : vector<8x8xf32> -> vector<8x8xf32>
    %cst_14 = arith.constant dense<0xFF800000> : vector<8xf32>
    %23 = vector.multi_reduction <maximumf>, %22, %cst_14 [1] : vector<8x8xf32> to vector<8xf32>
    %24 = vector.shape_cast %23 : vector<8xf32> to vector<8x1xf32>
    %25 = vector.broadcast %24 : vector<8x1xf32> to vector<8x8xf32>
    %26 = arith.subf %22, %25 : vector<8x8xf32>
    %27 = math.exp %26 : vector<8x8xf32>
    %cst_15 = arith.constant dense<0.000000e+00> : vector<8xf32>
    %28 = vector.multi_reduction <add>, %27, %cst_15 [1] : vector<8x8xf32> to vector<8xf32>
    %29 = vector.shape_cast %28 : vector<8xf32> to vector<8x1xf32>
    %30 = vector.broadcast %29 : vector<8x1xf32> to vector<8x8xf32>
    %31 = arith.divf %27, %30 : vector<8x8xf32>
    %c0_16 = arith.constant 0 : index
    %c0_17 = arith.constant 0 : index
    %32 = vector.load %arg7[%c0_16, %c0_17] : memref<8x8xf32, #tpu.memory_space<vmem>>, vector<8x8xf32>
    tpu.vector_store %arg7[%c0_16, %c0_17], %31 {strides = array<i32>} : memref<8x8xf32, #tpu.memory_space<vmem>>, vector<8x8xf32>,
    return
  }
  func.func @transform_0(%arg0: i32) -> (i32, i32, i32) {
    %c0_i32 = arith.constant 0 : i32
    %c0_i32_0 = arith.constant 0 : i32
    %c0_i32_1 = arith.constant 0 : i32
    return %c0_i32, %arg0, %c0_i32_0 : i32, i32, i32
  }
  func.func @transform_1(%arg0: i32) -> (i32, i32) {
    %c0_i32 = arith.constant 0 : i32
    %c0_i32_0 = arith.constant 0 : i32
    return %arg0, %c0_i32 : i32, i32
  }
  func.func @transform_2(%arg0: i32) -> (i32, i32) {
    %c0_i32 = arith.constant 0 : i32
    %c0_i32_0 = arith.constant 0 : i32
    %c0_i32_1 = arith.constant 0 : i32
    return %c0_i32, %c0_i32_0 : i32, i32
  }
  func.func @transform_3(%arg0: i32) -> (i32, i32) {
    %c0_i32 = arith.constant 0 : i32
    %c0_i32_0 = arith.constant 0 : i32
    %c0_i32_1 = arith.constant 0 : i32
    return %c0_i32, %c0_i32_0 : i32, i32
  }
  func.func @transform_4(%arg0: i32) -> (i32, i32) {
    %c0_i32 = arith.constant 0 : i32
    %c0_i32_0 = arith.constant 0 : i32
    %c0_i32_1 = arith.constant 0 : i32
    return %c0_i32, %c0_i32_0 : i32, i32
  }
  func.func @transform_5(%arg0: i32) -> (i32, i32) {
    %c0_i32 = arith.constant 0 : i32
    %c0_i32_0 = arith.constant 0 : i32
    %c0_i32_1 = arith.constant 0 : i32
    return %c0_i32, %c0_i32_0 : i32, i32
  }
  func.func @transform_6(%arg0: i32) -> (i32, i32) {
    %c0_i32 = arith.constant 0 : i32
    %c0_i32_0 = arith.constant 0 : i32
    return %arg0, %c0_i32 : i32, i32
  }
}

</mosaic_0001>

<llo_original>
// kernel: tpu_custom_call.1
$region0: #{tpu_custom_call.1}
  #allocation0 [shape = 'u32[]', space=smem, size = 0x4, offset = 0x4, fixed_abs, tag = 'smem constant byte address 0x4 - core index']
  #allocation1 [shape = 'u32[72,128]{1,0:T(1,128)}', space=vmem, size = 0x9000, scoped, tag = 'internal scratch']
  %s0 = inlined_call_operand.hbm [shape: f32[8,16,32], index: 0, kind: input, shape index: {}]
  %s1 = inlined_call_operand.hbm [shape: f32[16,32], index: 1, kind: input, shape index: {}]
  %s2 = inlined_call_operand.hbm [shape: bf16[32,32], index: 2, kind: input, shape index: {}]
  %s3 = inlined_call_operand.hbm [shape: bf16[32,32], index: 3, kind: input, shape index: {}]
  %s4 = inlined_call_operand.vmem [shape: f32[1,32], index: 4, kind: input, shape index: {}]
  %s5 = inlined_call_operand.vmem [shape: f32[1,32], index: 5, kind: input, shape index: {}]
  %s6 = inlined_call_operand.vmem [shape: f32[16,8], index: 6, kind: output, shape index: {}]
  %s7 = sld [smem:[#allocation0]]
  $region73: #{tpu_custom_call.1} parent=0
    _
  %s9 = ssub.s32 1, %s7
  %s10 = scalar_select 0, %s9, %s7
  $region1: #{tpu_custom_call.1} parent=0
    #allocation2 [shape = 'u8[65536]{0}', space=vmem, size = 0x10000, scoped, tag = 'input window, operand 0']
    #allocation3 [shape = 's32[2]{0}', space=sflag, size = 0x8, scoped, tag = 'scoped memory for tpu_custom_call.1']
    #allocation4 [shape = 'u8[8192]{0}', space=vmem, size = 0x2000, scoped, tag = 'input window, operand 1']
    #allocation5 [shape = 's32[2]{0}', space=sflag, size = 0x8, scoped, tag = 'scoped memory for tpu_custom_call.1']
    #allocation6 [shape = 'u8[8192]{0}', space=vmem, size = 0x2000, scoped, tag = 'input window, operand 2, single buffered']
    #allocation7 [shape = 'u8[8192]{0}', space=vmem, size = 0x2000, scoped, tag = 'input window, operand 3, single buffered']
    #allocation8 [shape = 's32[1]{0}', space=sflag, size = 0x4, scoped, tag = 'scoped memory for tpu_custom_call.1']
    %11 = vsyncpa [#allocation3], 0
    %s12 = scalar_lea.sflag [#allocation3], 1
    %13 = vsyncpa %s12, 0
    %14 = vsyncpa [#allocation5], 0
    %s15 = scalar_lea.sflag [#allocation5], 1
    %16 = vsyncpa %s15, 0
    %17 = vsyncpa [#allocation8], 0
    loop: start=0, step=1, limit=4
    $region2: #{tpu_custom_call.1} parent=1 // loop_pre_header
      _
    $region3: #{tpu_custom_call.1} parent=1 // loop_header
      %s19 = sphi 0, %s23
      %p20 = scmp.ge.s32.totalorder %s19, 4
      %s29 = sphi 0, %s31
      %s32 = sphi 0, %s29
      %s33 = sphi 0, %s32
      %s49 = sphi 0, %s33
      %s55 = sphi 0, %s57
      %s58 = sphi 0, %s55
      %s59 = sphi 0, %s58
      %s75 = sphi 0, %s59
      %s79 = sphi 0, %s79
      %s81 = sphi 0, %s79
      %s82 = sphi 0, %s81
      %s96 = sphi 0, %s82
      %s100 = sphi 0, %s100
      %s102 = sphi 0, %s100
      %s103 = sphi 0, %s102
      %s117 = sphi 0, %s103
      %s121 = sphi 0, %s121
      %s123 = sphi 0, %s121
      %s124 = sphi 0, %s123
      %s138 = sphi 0, %s124
      %s142 = sphi 0, %s142
      %s144 = sphi 0, %s142
      %s145 = sphi 0, %s144
      %s159 = sphi 0, %s145
      %s165 = sphi 0, %s167
      %s168 = sphi 0, %s165
      %s169 = sphi 0, %s168
      %s185 = sphi 0, %s169
    $region4: #{tpu_custom_call.1} parent=1 // loop_header_branch
      %22 = sbr.rel (%p20) target = $region8
    $region5: #{tpu_custom_call.1} parent=1 // loop_body
      %s24 = ssub.s32 %s19, 1
      %s25 = ssub.s32 %s19, 2
      %s26 = sadd.s32 %s19, 1
      %s27 = ssub.s32 %s19, %s26
      %p28 = scmp.eq.s32.totalorder %s27, 0
      %s30 = sadd.s32 %s29, 1
      %s31 = scalar_select %p28, %s29, %s30
      %p34 = pneg %p28
      %p35 = scmp.eq.s32.totalorder %s19, 1
      %p36 = por %p34, %p35
      %p37 = scmp.ne.s32.totalorder %s29, %s32
      %p38 = scmp.eq.s32.totalorder %s19, 0
      %p39 = por %p37, %p38
      %p40 = scmp.ne.s32.totalorder %s29, %s32
      %p41 = scmp.eq.s32.totalorder %s24, 1
      %p42 = por %p40, %p41
      %p43 = scmp.ne.s32.totalorder %s32, %s33
      %p44 = scmp.eq.s32.totalorder %s24, 0
      %p45 = por %p43, %p44
      %p46 = scmp.ne.s32.totalorder %s32, %s33
      %p47 = scmp.eq.s32.totalorder %s25, 1
      %p48 = por %p46, %p47
      %p50 = scmp.ne.s32.totalorder %s33, %s49
      %p51 = scmp.eq.s32.totalorder %s25, 0
      %p52 = por %p50, %p51
      %s53 = ssub.s32 %s19, %s26
      %p54 = scmp.eq.s32.totalorder %s53, 0
      %s56 = sadd.s32 %s55, 1
      %s57 = scalar_select %p54, %s55, %s56
      %p60 = pneg %p54
      %p61 = scmp.eq.s32.totalorder %s19, 1
      %p62 = por %p60, %p61
      %p63 = scmp.ne.s32.totalorder %s55, %s58
      %p64 = scmp.eq.s32.totalorder %s19, 0
      %p65 = por %p63, %p64
      %p66 = scmp.ne.s32.totalorder %s55, %s58
      %p67 = scmp.eq.s32.totalorder %s24, 1
      %p68 = por %p66, %p67
      %p69 = scmp.ne.s32.totalorder %s58, %s59
      %p70 = scmp.eq.s32.totalorder %s24, 0
      %p71 = por %p69, %p70
      %p72 = scmp.ne.s32.totalorder %s58, %s59
      %p73 = scmp.eq.s32.totalorder %s25, 1
      %p74 = por %p72, %p73
      %p76 = scmp.ne.s32.totalorder %s59, %s75
      %p77 = scmp.eq.s32.totalorder %s25, 0
      %p78 = por %p76, %p77
      %s80 = sadd.s32 %s79, 1
      %p83 = scmp.eq.s32.totalorder %s19, 1
      %p84 = scmp.ne.s32.totalorder %s79, %s81
      %p85 = scmp.eq.s32.totalorder %s19, 0
      %p86 = por %p84, %p85
      %p87 = scmp.ne.s32.totalorder %s79, %s81
      %p88 = scmp.eq.s32.totalorder %s24, 1
      %p89 = por %p87, %p88
      %p90 = scmp.ne.s32.totalorder %s81, %s82
      %p91 = scmp.eq.s32.totalorder %s24, 0
      %p92 = por %p90, %p91
      %p93 = scmp.ne.s32.totalorder %s81, %s82
      %p94 = scmp.eq.s32.totalorder %s25, 1
      %p95 = por %p93, %p94
      %p97 = scmp.ne.s32.totalorder %s82, %s96
      %p98 = scmp.eq.s32.totalorder %s25, 0
      %p99 = por %p97, %p98
      %s101 = sadd.s32 %s100, 1
      %p104 = scmp.eq.s32.totalorder %s19, 1
      %p105 = scmp.ne.s32.totalorder %s100, %s102
      %p106 = scmp.eq.s32.totalorder %s19, 0
      %p107 = por %p105, %p106
      %p108 = scmp.ne.s32.totalorder %s100, %s102
      %p109 = scmp.eq.s32.totalorder %s24, 1
      %p110 = por %p108, %p109
      %p111 = scmp.ne.s32.totalorder %s102, %s103
      %p112 = scmp.eq.s32.totalorder %s24, 0
      %p113 = por %p111, %p112
      %p114 = scmp.ne.s32.totalorder %s102, %s103
      %p115 = scmp.eq.s32.totalorder %s25, 1
      %p116 = por %p114, %p115
      %p118 = scmp.ne.s32.totalorder %s103, %s117
      %p119 = scmp.eq.s32.totalorder %s25, 0
      %p120 = por %p118, %p119
      %s122 = sadd.s32 %s121, 1
      %p125 = scmp.eq.s32.totalorder %s19, 1
      %p126 = scmp.ne.s32.totalorder %s121, %s123
      %p127 = scmp.eq.s32.totalorder %s19, 0
      %p128 = por %p126, %p127
      %p129 = scmp.ne.s32.totalorder %s121, %s123
      %p130 = scmp.eq.s32.totalorder %s24, 1
      %p131 = por %p129, %p130
      %p132 = scmp.ne.s32.totalorder %s123, %s124
      %p133 = scmp.eq.s32.totalorder %s24, 0
      %p134 = por %p132, %p133
      %p135 = scmp.ne.s32.totalorder %s123, %s124
      %p136 = scmp.eq.s32.totalorder %s25, 1
      %p137 = por %p135, %p136
      %p139 = scmp.ne.s32.totalorder %s124, %s138
      %p140 = scmp.eq.s32.totalorder %s25, 0
      %p141 = por %p139, %p140
      %s143 = sadd.s32 %s142, 1
      %p146 = scmp.eq.s32.totalorder %s19, 1
      %p147 = scmp.ne.s32.totalorder %s142, %s144
      %p148 = scmp.eq.s32.totalorder %s19, 0
      %p149 = por %p147, %p148
      %p150 = scmp.ne.s32.totalorder %s142, %s144
      %p151 = scmp.eq.s32.totalorder %s24, 1
      %p152 = por %p150, %p151
      %p153 = scmp.ne.s32.totalorder %s144, %s145
      %p154 = scmp.eq.s32.totalorder %s24, 0
      %p155 = por %p153, %p154
      %p156 = scmp.ne.s32.totalorder %s144, %s145
      %p157 = scmp.eq.s32.totalorder %s25, 1
      %p158 = por %p156, %p157
      %p160 = scmp.ne.s32.totalorder %s145, %s159
      %p161 = scmp.eq.s32.totalorder %s25, 0
      %p162 = por %p160, %p161
      %s163 = ssub.s32 %s19, %s26
      %p164 = scmp.eq.s32.totalorder %s163, 0
      %s166 = sadd.s32 %s165, 1
      %s167 = scalar_select %p164, %s165, %s166
      %p170 = pneg %p164
      %p171 = scmp.eq.s32.totalorder %s19, 1
      %p172 = por %p170, %p171
      %p173 = scmp.ne.s32.totalorder %s165, %s168
      %p174 = scmp.eq.s32.totalorder %s19, 0
      %p175 = por %p173, %p174
      %p176 = scmp.ne.s32.totalorder %s165, %s168
      %p177 = scmp.eq.s32.totalorder %s24, 1
      %p178 = por %p176, %p177
      %p179 = scmp.ne.s32.totalorder %s168, %s169
      %p180 = scmp.eq.s32.totalorder %s24, 0
      %p181 = por %p179, %p180
      %p182 = scmp.ne.s32.totalorder %s168, %s169
      %p183 = scmp.eq.s32.totalorder %s25, 1
      %p184 = por %p182, %p183
      %p186 = scmp.ne.s32.totalorder %s169, %s185
      %p187 = scmp.eq.s32.totalorder %s25, 0
      %p188 = por %p186, %p187
      %p189 = scmp.le.s32.totalorder 1, %s19
      %p190 = scmp.lt.s32.totalorder %s19, 3
      %p191 = pnand %p189, %p190
      %p192 = pneg %p191
      // Predicated region
      $region9: #{tpu_custom_call.1} parent=5 // pred_check
        _
      $region10: #{tpu_custom_call.1} parent=5 // pred_check_branch
        %194 = sbr.rel (%p191) target = $region12
      $region11: #{tpu_custom_call.1} parent=5 // pred_region
        %s195 = ssub.s32 %s19, 1
        // Predicated region
        $region13: #{tpu_custom_call.1} parent=11 // pred_check
          %p196 = pneg %p92
        $region14: #{tpu_custom_call.1} parent=11 // pred_check_branch
          %198 = sbr.rel (%p196) target = $region16
        $region15: #{tpu_custom_call.1} parent=11 // pred_region
          %200 = vsyncadd [#allocation5], 0
          %s201 = sshll.u32 %s2, 4
          %s202 = int_to_ptr.hbm [resolvable:$true] %s201
          %s203 = sshll.u32 [#allocation6], 4
          %s204 = int_to_ptr.vmem [resolvable:$true] %s203
          %209 = dma.hbm_to_vmem [thread:$0]  %s202, 256, %s204, [#allocation5], 64, 64, 4
        $region16: #{tpu_custom_call.1} parent=11 // pred_fallthru
          _
        // Predicated region
        $region17: #{tpu_custom_call.1} parent=11 // pred_check
          %p210 = pneg %p113
        $region18: #{tpu_custom_call.1} parent=11 // pred_check_branch
          %212 = sbr.rel (%p210) target = $region20
        $region19: #{tpu_custom_call.1} parent=11 // pred_region
          %214 = vsyncadd [#allocation8], 0
          %s215 = sshll.u32 %s3, 4
          %s216 = int_to_ptr.hbm [resolvable:$true] %s215
          %s217 = sshll.u32 [#allocation7], 4
          %s218 = int_to_ptr.vmem [resolvable:$true] %s217
          %223 = dma.hbm_to_vmem [thread:$0]  %s216, 256, %s218, [#allocation8], 64, 64, 4
        $region20: #{tpu_custom_call.1} parent=11 // pred_fallthru
          _
        // Predicated region
        $region21: #{tpu_custom_call.1} parent=11 // pred_check
          %p224 = pneg %p134
        $region22: #{tpu_custom_call.1} parent=11 // pred_check_branch
          %226 = sbr.rel (%p224) target = $region24
        $region23: #{tpu_custom_call.1} parent=11 // pred_region
          _
        $region24: #{tpu_custom_call.1} parent=11 // pred_fallthru
          _
        // Predicated region
        $region25: #{tpu_custom_call.1} parent=11 // pred_check
          %p227 = pneg %p155
        $region26: #{tpu_custom_call.1} parent=11 // pred_check_branch
          %229 = sbr.rel (%p227) target = $region28
        $region27: #{tpu_custom_call.1} parent=11 // pred_region
          _
        $region28: #{tpu_custom_call.1} parent=11 // pred_fallthru
          _
      $region12: #{tpu_custom_call.1} parent=5 // pred_fallthru
        _
      %p230 = scmp.lt.s32.totalorder %s19, 2
      // Predicated region
      $region29: #{tpu_custom_call.1} parent=5 // pred_check
        %p231 = pneg %p230
      $region30: #{tpu_custom_call.1} parent=5 // pred_check_branch
        %233 = sbr.rel (%p231) target = $region32
      $region31: #{tpu_custom_call.1} parent=5 // pred_region
        // Predicated region
        $region33: #{tpu_custom_call.1} parent=31 // pred_check
          %p234 = pneg %p39
        $region34: #{tpu_custom_call.1} parent=31 // pred_check_branch
          %236 = sbr.rel (%p234) target = $region36
        $region35: #{tpu_custom_call.1} parent=31 // pred_region
          %s237 = sand.u32 %s29, 1
          %s238 = scalar_lea.sflag [#allocation3], %s237
          %s239 = sand.u32 %s29, 1
          %s240 = smul.addr %s239, 64
          %s241 = scalar_lea.vmem [#allocation2], %s240
          %243 = vsyncadd %s238, 0
          %s244 = smul.addr %s19, 8
          %s245 = scalar_lea.hbm %s0, %s244
          %s246 = sshll.u32 %s245, 4
          %s247 = int_to_ptr.hbm [resolvable:$true] %s246
          %s248 = sshll.u32 %s241, 4
          %s249 = int_to_ptr.vmem [resolvable:$true] %s248
          %254 = dma.hbm_to_vmem [thread:$0]  %s247, 1024, %s249, %s238, 256, 128, 8
        $region36: #{tpu_custom_call.1} parent=31 // pred_fallthru
          _
        // Predicated region
        $region37: #{tpu_custom_call.1} parent=31 // pred_check
          %p255 = pneg %p65
        $region38: #{tpu_custom_call.1} parent=31 // pred_check_branch
          %257 = sbr.rel (%p255) target = $region40
        $region39: #{tpu_custom_call.1} parent=31 // pred_region
          %s258 = sand.u32 %s19, 1
          %s259 = scalar_lea.sflag [#allocation5], %s258
          %s260 = sand.u32 %s55, 1
          %s261 = smul.addr %s260, 8
          %s262 = scalar_lea.vmem [#allocation4], %s261
          %264 = vsyncadd %s259, 0
          %s265 = smul.addr %s19, 8
          %s266 = scalar_lea.hbm %s1, %s265
          %s268 = sshll.u32 %s266, 4
          %s269 = int_to_ptr.hbm [resolvable:$true] %s268
          %s270 = sshll.u32 %s262, 4
          %s271 = int_to_ptr.vmem [resolvable:$true] %s270
          %273 = dma.hbm_to_vmem [thread:$0]  %s269, 128, %s271, %s259
        $region40: #{tpu_custom_call.1} parent=31 // pred_fallthru
          _
      $region32: #{tpu_custom_call.1} parent=5 // pred_fallthru
        _
      %p274 = scmp.le.s32.totalorder 1, %s19
      %p275 = scmp.lt.s32.totalorder %s19, 3
      %p276 = pnand %p274, %p275
      %p277 = pneg %p276
      // Predicated region
      $region41: #{tpu_custom_call.1} parent=5 // pred_check
        _
      $region42: #{tpu_custom_call.1} parent=5 // pred_check_branch
        %279 = sbr.rel (%p276) target = $region44
      $region43: #{tpu_custom_call.1} parent=5 // pred_region
        %s280 = ssub.s32 %s19, 1
        %s281 = sand.u32 %s32, 1
        %s282 = scalar_lea.sflag [#allocation3], %s281
        %s283 = sand.u32 %s32, 1
        %s284 = smul.addr %s283, 64
        %s285 = scalar_lea.vmem [#allocation2], %s284
        // Predicated region
        $region45: #{tpu_custom_call.1} parent=43 // pred_check
          %p286 = pneg %p45
        $region46: #{tpu_custom_call.1} parent=43 // pred_check_branch
          %288 = sbr.rel (%p286) target = $region48
        $region47: #{tpu_custom_call.1} parent=43 // pred_region
          %290 = dma.done %s282, 1024
        $region48: #{tpu_custom_call.1} parent=43 // pred_fallthru
          _
        %s291 = sand.u32 %s24, 1
        %s292 = scalar_lea.sflag [#allocation5], %s291
        %s293 = sand.u32 %s58, 1
        %s294 = smul.addr %s293, 8
        %s295 = scalar_lea.vmem [#allocation4], %s294
        // Predicated region
        $region49: #{tpu_custom_call.1} parent=43 // pred_check
          %p296 = pneg %p71
        $region50: #{tpu_custom_call.1} parent=43 // pred_check_branch
          %298 = sbr.rel (%p296) target = $region52
        $region51: #{tpu_custom_call.1} parent=43 // pred_region
          %300 = dma.done %s292, 128
        $region52: #{tpu_custom_call.1} parent=43 // pred_fallthru
          _
        // Predicated region
        $region53: #{tpu_custom_call.1} parent=43 // pred_check
          %p301 = pneg %p92
        $region54: #{tpu_custom_call.1} parent=43 // pred_check_branch
          %303 = sbr.rel (%p301) target = $region56
        $region55: #{tpu_custom_call.1} parent=43 // pred_region
          %305 = dma.done [#allocation5], 256
        $region56: #{tpu_custom_call.1} parent=43 // pred_fallthru
          _
        // Predicated region
        $region57: #{tpu_custom_call.1} parent=43 // pred_check
          %p306 = pneg %p113
        $region58: #{tpu_custom_call.1} parent=43 // pred_check_branch
          %308 = sbr.rel (%p306) target = $region60
        $region59: #{tpu_custom_call.1} parent=43 // pred_region
          %310 = dma.done [#allocation8], 256
        $region60: #{tpu_custom_call.1} parent=43 // pred_fallthru
          _
        %s311 = sand.u32 %s32, 1
        %s312 = scalar_lea.sflag [#allocation3], %s311
        %s313 = sand.u32 %s32, 1
        %s314 = smul.addr %s313, 64
        %s315 = scalar_lea.vmem [#allocation2], %s314
        %p316 = pneg %p45
        %p317 = pneg %p42
        %s318 = sand.u32 %s24, 1
        %s319 = scalar_lea.sflag [#allocation5], %s318
        %s320 = sand.u32 %s58, 1
        %s321 = smul.addr %s320, 8
        %s322 = scalar_lea.vmem [#allocation4], %s321
        %p323 = pneg %p71
        %p324 = pneg %p68
        %p325 = pneg %p92
        %p326 = pneg %p89
        %p327 = pneg %p113
        %p328 = pneg %p110
        %p329 = pneg %p134
        %p330 = pneg %p131
        %p331 = pneg %p155
        %p332 = pneg %p152
        %p333 = pneg %p181
        %p334 = pneg %p178
        %p335 = scmp.lt.s32.totalorder %s24, 1
        %s336 = scalar_select %p335, %s24, 1
        %s337 = smul.addr %s336, 8
        %s338 = scalar_lea.vmem %s6, %s337
        %p339 = scmp.lt.s32.totalorder %s24, 1
        %s340 = scalar_select %p339, %s24, 1
        %s341 = smul.addr %s340, 8
        %s342 = scalar_lea.vmem %s6, %s341
        %v344 = vld [vmem:[%s295] sm:$0xff]
        %v345 = vpack.c.bf16 %v344, %v344
        %v346 = vld [vmem:[#allocation6] sm:$0xf]
        %v347 = vld [vmem:[#allocation6 + $0x4] sm:$0xf]
        %v348 = vld [vmem:[#allocation6 + $0x8] sm:$0xf]
        %v349 = vld [vmem:[#allocation6 + $0xc] sm:$0xf]
        %v350 = vld [vmem:[%s4] sm:$0x1]
        %v352 = vperm.slane %v350, 0
        %v358 = vunpack.c.l.b16 %v346
        %v359 = vunpack.c.l.b16 %v347
        %v360 = vunpack.c.l.b16 %v348
        %v361 = vunpack.c.l.b16 %v349
        %v362 = vpack.c.b16 %v359, %v358
        %v363 = vpack.c.b16 %v361, %v360
        %vm366 = vcmask 261120
        %v368 = vsel %vm366, %v345, 0
        %370 = vmatpush.bf16.msra.mxu0 0
        %371 = vmatpush.bf16.msra.mxu0 0
        %372 = vmatpush.bf16.msra.mxu0 0
        %373 = vmatpush.bf16.msra.mxu0 0
        %374 = vmatpush.bf16.msra.mxu0 0
        %375 = vmatpush.bf16.msra.mxu0 0
        %376 = vmatpush.bf16.msra.mxu0 %v363
        %377 = vmatpush.bf16.msra.mxu0 %v362
        %378 = vmatmul.bf16.gmra.mxu0 %v368
        %v379 = vpop.f32.mrf.mxu0
        %v380 = vadd.f32 %v352, %v379
        %v381 = vpop.f32.mrf.mxu0
        %382 = vdwg.mxu0
        %v383 = vld [vmem:[%s285] sm:$0xff]
        %v384 = vld [vmem:[%s285 + $0x8] sm:$0xff]
        %v385 = vld [vmem:[%s285 + $0x10] sm:$0xff]
        %v386 = vld [vmem:[%s285 + $0x18] sm:$0xff]
        %v387 = vld [vmem:[%s285 + $0x20] sm:$0xff]
        %v388 = vld [vmem:[%s285 + $0x28] sm:$0xff]
        %v389 = vld [vmem:[%s285 + $0x30] sm:$0xff]
        %v390 = vld [vmem:[%s285 + $0x38] sm:$0xff]
        %v391 = vpack.c.bf16 %v383, %v383
        %v392 = vpack.c.bf16 %v384, %v384
        %v393 = vpack.c.bf16 %v385, %v385
        %v394 = vpack.c.bf16 %v386, %v386
        %v395 = vpack.c.bf16 %v387, %v387
        %v396 = vpack.c.bf16 %v388, %v388
        %v397 = vpack.c.bf16 %v389, %v389
        %v398 = vpack.c.bf16 %v390, %v390
        %v399 = vld [vmem:[#allocation7] sm:$0xf]
        %v400 = vld [vmem:[#allocation7 + $0x4] sm:$0xf]
        %v401 = vld [vmem:[#allocation7 + $0x8] sm:$0xf]
        %v402 = vld [vmem:[#allocation7 + $0xc] sm:$0xf]
        %v411 = vunpack.c.l.b16 %v391
        %v412 = vunpack.c.l.b16 %v392
        %v413 = vunpack.c.l.b16 %v393
        %v414 = vunpack.c.l.b16 %v394
        %v415 = vunpack.c.l.b16 %v395
        %v416 = vunpack.c.l.b16 %v396
        %v417 = vunpack.c.l.b16 %v397
        %v418 = vunpack.c.l.b16 %v398
        %v419 = vpack.c.b16 %v412, %v411
        %v420 = vpack.c.b16 %v414, %v413
        %v421 = vpack.c.b16 %v416, %v415
        %v422 = vpack.c.b16 %v418, %v417
        %v427 = vunpack.c.l.b16 %v399
        %v428 = vunpack.c.l.b16 %v400
        %v429 = vunpack.c.l.b16 %v401
        %v430 = vunpack.c.l.b16 %v402
        %v431 = vpack.c.b16 %v428, %v427
        %v432 = vpack.c.b16 %v430, %v429
        %v436 = vsel %vm366, %v419, 0
        %v439 = vsel %vm366, %v420, 0
        %v442 = vsel %vm366, %v421, 0
        %v445 = vsel %vm366, %v422, 0
        %447 = vmatpush.bf16.msra.mxu0 0
        %448 = vmatpush.bf16.msra.mxu0 0
        %449 = vmatpush.bf16.msra.mxu0 0
        %450 = vmatpush.bf16.msra.mxu0 0
        %451 = vmatpush.bf16.msra.mxu0 0
        %452 = vmatpush.bf16.msra.mxu0 0
        %453 = vmatpush.bf16.msra.mxu0 %v432
        %454 = vmatpush.bf16.msra.mxu0 %v431
        %455 = vmatmul.bf16.gmra.mxu0 %v436
        %v456 = vpop.f32.mrf.mxu0
        %v457 = vadd.f32 0.0, %v456
        %v458 = vpop.f32.mrf.mxu0
        %v459 = vadd.f32 0.0, %v458
        %460 = vmatmul.bf16.gmra.mxu0 %v439
        %v461 = vpop.f32.mrf.mxu0
        %v462 = vadd.f32 0.0, %v461
        %v463 = vpop.f32.mrf.mxu0
        %v464 = vadd.f32 0.0, %v463
        %465 = vmatmul.bf16.gmra.mxu0 %v442
        %v466 = vpop.f32.mrf.mxu0
        %v467 = vadd.f32 0.0, %v466
        %v468 = vpop.f32.mrf.mxu0
        %v469 = vadd.f32 0.0, %v468
        %470 = vmatmul.bf16.gmra.mxu0 %v445
        %v471 = vpop.f32.mrf.mxu0
        %v472 = vadd.f32 0.0, %v471
        %v473 = vpop.f32.mrf.mxu0
        %v474 = vadd.f32 0.0, %v473
        %475 = vdwg.mxu0
        %v476 = vadd.f32 %v457, %v380
        %v477 = vadd.f32 %v459, %v380
        %v478 = vadd.f32 %v462, %v380
        %v479 = vadd.f32 %v464, %v380
        %v480 = vadd.f32 %v467, %v380
        %v481 = vadd.f32 %v469, %v380
        %v482 = vadd.f32 %v472, %v380
        %v483 = vadd.f32 %v474, %v380
        %v484 = vtanh.pop %v476
        %v485 = vtanh.pop %v477
        %v486 = vtanh.pop %v478
        %v487 = vtanh.pop %v479
        %v488 = vtanh.pop %v480
        %v489 = vtanh.pop %v481
        %v490 = vtanh.pop %v482
        %v491 = vtanh.pop %v483
        %v492 = vld [vmem:[%s5] sm:$0x1]
        %v494 = vperm.slane %v492, 0
        %v496 = vmul.f32 %v484, %v494
        %v497 = vmul.f32 %v485, %v494
        %v498 = vmul.f32 %v486, %v494
        %v499 = vmul.f32 %v487, %v494
        %v500 = vmul.f32 %v488, %v494
        %v501 = vmul.f32 %v489, %v494
        %v502 = vmul.f32 %v490, %v494
        %v503 = vmul.f32 %v491, %v494
        %v504 = vsel %vm366, %v496, 0.0
        %505 = vadd.xlane.f32.xlu0 %v504
        %v506 = vpop.xlane.xlu0 %505
        %v507 = vsel %vm366, %v497, 0.0
        %508 = vadd.xlane.f32.xlu0 %v507
        %v509 = vpop.xlane.xlu0 %508
        %v510 = vsel %vm366, %v498, 0.0
        %511 = vadd.xlane.f32.xlu0 %v510
        %v512 = vpop.xlane.xlu0 %511
        %v513 = vsel %vm366, %v499, 0.0
        %514 = vadd.xlane.f32.xlu0 %v513
        %v515 = vpop.xlane.xlu0 %514
        %v516 = vsel %vm366, %v500, 0.0
        %517 = vadd.xlane.f32.xlu0 %v516
        %v518 = vpop.xlane.xlu0 %517
        %v519 = vsel %vm366, %v501, 0.0
        %520 = vadd.xlane.f32.xlu0 %v519
        %v521 = vpop.xlane.xlu0 %520
        %v522 = vsel %vm366, %v502, 0.0
        %523 = vadd.xlane.f32.xlu0 %v522
        %v524 = vpop.xlane.xlu0 %523
        %v525 = vsel %vm366, %v503, 0.0
        %526 = vadd.xlane.f32.xlu0 %v525
        %v527 = vpop.xlane.xlu0 %526
        %v536 = vlaneseq
        %v537 = vand.u32 %v536, 127
        %v538 = vperm.slane %v506, %v537
        %v539 = vperm.slane %v509, %v537
        %v540 = vperm.slane %v512, %v537
        %v541 = vperm.slane %v515, %v537
        %v542 = vperm.slane %v518, %v537
        %v543 = vperm.slane %v521, %v537
        %v544 = vperm.slane %v524, %v537
        %v545 = vperm.slane %v527, %v537
        %vm546 = vcmask 1041409
        %v547 = vsel %vm546, %v539, %v538
        %vm548 = vcmask 1042434
        %v549 = vsel %vm548, %v540, %v547
        %vm550 = vcmask 1043459
        %v551 = vsel %vm550, %v541, %v549
        %vm552 = vcmask 1044484
        %v553 = vsel %vm552, %v542, %v551
        %vm554 = vcmask 1045509
        %v555 = vsel %vm554, %v543, %v553
        %vm556 = vcmask 1046534
        %v557 = vsel %vm556, %v544, %v555
        %vm558 = vcmask 1047559
        %v559 = vsel %vm558, %v545, %v557
        %561 = vxpose.xlu0.b32.start [1/16] %v559, 128
        %562 = vxpose.xlu0.b32.cont [2/16] 0.0, 128
        %563 = vxpose.xlu0.b32.cont [3/16] 0.0, 128
        %564 = vxpose.xlu0.b32.cont [4/16] 0.0, 128
        %565 = vxpose.xlu0.b32.cont [5/16] 0.0, 128
        %566 = vxpose.xlu0.b32.cont [6/16] 0.0, 128
        %567 = vxpose.xlu0.b32.cont [7/16] 0.0, 128
        %568 = vxpose.xlu0.b32.cont [8/16] 0.0, 128
        %569 = vxpose.xlu0.b32.cont [9/16] 0.0, 128
        %570 = vxpose.xlu0.b32.cont [10/16] 0.0, 128
        %571 = vxpose.xlu0.b32.cont [11/16] 0.0, 128
        %572 = vxpose.xlu0.b32.cont [12/16] 0.0, 128
        %573 = vxpose.xlu0.b32.cont [13/16] 0.0, 128
        %574 = vxpose.xlu0.b32.cont [14/16] 0.0, 128
        %575 = vxpose.xlu0.b32.cont [15/16] 0.0, 128
        %576 = vxpose.xlu0.b32.end [16/16] 0.0, 128
        %v577 = vpop.trf.xlu0
        %v578 = vpop.trf.xlu0
        %v579 = vpop.trf.xlu0
        %v580 = vpop.trf.xlu0
        %v581 = vpop.trf.xlu0
        %v582 = vpop.trf.xlu0
        %v583 = vpop.trf.xlu0
        %v584 = vpop.trf.xlu0
        %v585 = vpop.trf.xlu0
        %v586 = vpop.trf.xlu0
        %v587 = vpop.trf.xlu0
        %v588 = vpop.trf.xlu0
        %v589 = vpop.trf.xlu0
        %v590 = vpop.trf.xlu0
        %v591 = vpop.trf.xlu0
        %v592 = vpop.trf.xlu0
        %vm593 = vcmask 64512
        %v594 = vsel %vm593, %v577, -inf
        %595 = vmax.xlane.f32.xlu0 %v594
        %v596 = vpop.xlane.xlu0 %595
        %v597 = vsub.f32 %v577, %v596
        %v598 = vmul.f32 %v597, 1.442695
        %v599 = vpow.pop %v598
        %v600 = vsel %vm593, %v599, 0.0
        %601 = vadd.xlane.f32.xlu0 %v600
        %v602 = vpop.xlane.xlu0 %601
        %v603 = vrcp.pop %v602
        %v604 = vmul.f32 %v602, %v603
        %v605 = vsub.f32 1.0, %v604
        %v606 = vmul.f32 %v603, %v605
        %v607 = vadd.f32 %v603, %v606
        %vm608 = vweird.f32 %v602
        %vm609 = vweird.f32 %v603
        %vm610 = vmor %vm608, %vm609
        %v611 = vsel %vm610, %v603, %v607
        %v612 = vand.u32 2147483647, %v602
        %vm613 = vcmp.eq.f32.partialorder %v612, 8.507059e+37
        %v614 = vand.u32 %v602, 2147483648
        %v615 = vor.u32 1.1754944e-38, %v614
        %v616 = vsel %vm613, %v615, %v611
        %v617 = vmul.f32 %v599, %v616
        %618 = vst.msk [vmem:[%s342] sm:$0xff] %vm593, %v617
        %p619 = scmp.lt.s32.totalorder %s24, 1
        %s620 = scalar_select %p619, %s24, 1
        %s621 = smul.addr %s620, 8
        %s622 = scalar_lea.vmem %s6, %s621
        // Predicated region
        $region61: #{tpu_custom_call.1} parent=43 // pred_check
          %p623 = pneg %p178
        $region62: #{tpu_custom_call.1} parent=43 // pred_check_branch
          %625 = sbr.rel (%p623) target = $region64
        $region63: #{tpu_custom_call.1} parent=43 // pred_region
          _
        $region64: #{tpu_custom_call.1} parent=43 // pred_fallthru
          _
      $region44: #{tpu_custom_call.1} parent=5 // pred_fallthru
        _
      %p626 = scmp.le.s32.totalorder 2, %s19
      // Predicated region
      $region65: #{tpu_custom_call.1} parent=5 // pred_check
        %p627 = pneg %p626
      $region66: #{tpu_custom_call.1} parent=5 // pred_check_branch
        %629 = sbr.rel (%p627) target = $region68
      $region67: #{tpu_custom_call.1} parent=5 // pred_region
        %s630 = ssub.s32 %s19, 2
        // Predicated region
        $region69: #{tpu_custom_call.1} parent=67 // pred_check
          %p631 = pneg %p184
        $region70: #{tpu_custom_call.1} parent=67 // pred_check_branch
          %633 = sbr.rel (%p631) target = $region72
        $region71: #{tpu_custom_call.1} parent=67 // pred_region
          %p634 = scmp.lt.s32.totalorder %s25, 1
          %s635 = scalar_select %p634, %s25, 1
          %s636 = smul.addr %s635, 8
          %s637 = scalar_lea.vmem %s6, %s636
        $region72: #{tpu_custom_call.1} parent=67 // pred_fallthru
          _
      $region68: #{tpu_custom_call.1} parent=5 // pred_fallthru
        _
    $region6: #{tpu_custom_call.1} parent=1 // loop_footer
      %s23 = sadd.s32 1, %s19
    $region7: #{tpu_custom_call.1} parent=1 // loop_footer_branch
      %18 = sbr.rel target = $region3
    $region8: #{tpu_custom_call.1} parent=1 // loop_exit
      _
    %638 = vsyncpa [#allocation3], 1
    %s639 = scalar_lea.sflag [#allocation3], 1
    %640 = vsyncpa %s639, 1
    %641 = vsyncpa [#allocation5], 1
    %s642 = scalar_lea.sflag [#allocation5], 1
    %643 = vsyncpa %s642, 1
    %644 = vsyncpa [#allocation8], 1

</llo_original>
